<compile_context>
chip_gen: v7x
topology: tpu7x:2x2x1
jax: 0.10.0
libtpu: 0.0.40
codegen_flags: <defaults>
</compile_context>

<pallas_src>
import jax
import jax.numpy as jnp
from jax.experimental import pallas as pl
from jax.experimental.pallas import tpu as pltpu


def _mean_rows_kernel(x_ref, o_ref):
    # x_ref: (row_tile, cols) tile in VMEM, native input dtype
    # o_ref: (row_tile, 1)    tile in VMEM, output dtype
    x = x_ref[...].astype(jnp.float32)          # accumulate in f32
    inv_n = jnp.float32(1.0 / x.shape[-1])
    o_ref[...] = (jnp.sum(x, axis=-1, keepdims=True) * inv_n).astype(o_ref.dtype)


def _choose_row_tile(rows, cols, itemsize):
    """Pick a row tile giving ~2 MiB input blocks, sublane-aligned."""
    # Sublane packing: 8 rows for 4-byte, 16 for 2-byte, 32 for 1-byte dtypes.
    sublane = max(8, 32 // max(int(itemsize), 1))
    row_bytes = max(cols * itemsize, 1)
    target_bytes = 2 * 1024 * 1024              # ~2 MiB per input buffer
    tile = max(sublane, (target_bytes // row_bytes))
    tile = max(sublane, (tile // sublane) * sublane)
    if tile >= rows:
        # Single block spanning all rows: block dim == full array dim (legal,
        # and the whole problem is small enough that one step is optimal).
        return rows
    return tile


def expression_global_avg_pool(x):
    """Applies Expression(lambda u: u.mean(-1).mean(-1)) to an NCHW tensor."""
    B, C, H, W = x.shape
    rows, cols = B * C, H * W
    itemsize = jnp.dtype(x.dtype).itemsize

    # Row-major NCHW -> (B*C, H*W): a free metadata reshape, NO dtype cast
    # (kernel reads the native dtype straight from HBM).
    x2d = x.reshape(rows, cols)

    row_tile = _choose_row_tile(rows, cols, itemsize)
    grid = (pl.cdiv(rows, row_tile),)           # partial last block is OK:
                                                # its OOB rows land in discarded
                                                # OOB output regions.

    out2d = pl.pallas_call(
        _mean_rows_kernel,
        out_shape=jax.ShapeDtypeStruct((rows, 1), x.dtype),
        grid_spec=pltpu.PrefetchScalarGridSpec(
            num_scalar_prefetch=0,
            grid=grid,
            in_specs=[pl.BlockSpec((row_tile, cols), lambda i: (i, 0))],
            out_specs=pl.BlockSpec((row_tile, 1), lambda i: (i, 0)),
        ),
        compiler_params=pltpu.CompilerParams(
            dimension_semantics=("parallel",),
        ),
        cost_estimate=pl.CostEstimate(
            flops=rows * cols,                  # one add per element (approx.)
            transcendentals=0,
            bytes_accessed=rows * cols * itemsize + rows * itemsize,
        ),
    )(x2d)

    return out2d.reshape(B, C)


if __name__ == "__main__":
    key = jax.random.PRNGKey(0)
    B, C, H, W = 2, 4, 16, 16
    x = jax.random.normal(key, (B, C, H, W), dtype=jnp.float32)

    y = expression_global_avg_pool(x)
    jax.block_until_ready(y)

    # Reference (plain JAX) check of Expression(lambda u: u.mean(-1).mean(-1))
    y_ref = x.mean(axis=-1).mean(axis=-1)
    assert y.shape == (B, C), y.shape
    assert jnp.allclose(y, y_ref, atol=1e-5, rtol=1e-5)

    print("KERNEL_OK")
</pallas_src>

<mosaic_0001>
module attributes {stable_mosaic.version = 11 : i64} {
  func.func @_mean_rows_kernel(%arg0: i32, %arg1: memref<8x256xf32, #tpu.memory_space<vmem>>, %arg2: memref<8x1xf32, #tpu.memory_space<vmem>>) attributes {dimension_semantics = [#tpu.dimension_semantics<parallel>], iteration_bounds = array<i64: 1>, scalar_prefetch = 0 : i64, scratch_operands = 0 : i64, tpu.core_type = #tpu.core_type<tc>, window_params = [{transform_indices = @transform_0, window_bounds = array<i64: 8, 256>}, {transform_indices = @transform_1, window_bounds = array<i64: 8, 1>}]} {
    %c0 = arith.constant 0 : index
    %c0_0 = arith.constant 0 : index
    %0 = vector.load %arg1[%c0, %c0_0] : memref<8x256xf32, #tpu.memory_space<vmem>>, vector<8x256xf32>
    %cst = arith.constant dense<0.000000e+00> : vector<8xf32>
    %1 = vector.multi_reduction <add>, %0, %cst [1] : vector<8x256xf32> to vector<8xf32>
    %2 = vector.shape_cast %1 : vector<8xf32> to vector<8x1xf32>
    %cst_1 = arith.constant 3.906250e-03 : f32
    %3 = vector.broadcast %cst_1 : f32 to vector<8x1xf32>
    %4 = arith.mulf %2, %3 : vector<8x1xf32>
    %c0_2 = arith.constant 0 : index
    %c0_3 = arith.constant 0 : index
    %5 = vector.load %arg2[%c0_2, %c0_3] : memref<8x1xf32, #tpu.memory_space<vmem>>, vector<8x1xf32>
    tpu.vector_store %arg2[%c0_2, %c0_3], %4 {strides = array<i32>} : memref<8x1xf32, #tpu.memory_space<vmem>>, vector<8x1xf32>,
    return
  }
  func.func @transform_0(%arg0: i32) -> (i32, i32) {
    %c0_i32 = arith.constant 0 : i32
    %c0_i32_0 = arith.constant 0 : i32
    return %arg0, %c0_i32 : i32, i32
  }
  func.func @transform_1(%arg0: i32) -> (i32, i32) {
    %c0_i32 = arith.constant 0 : i32
    %c0_i32_0 = arith.constant 0 : i32
    return %arg0, %c0_i32 : i32, i32
  }
}

</mosaic_0001>

<llo_original>
// kernel: tpu_custom_call.1
$region0: #{tpu_custom_call.1}
  #allocation0 [shape = 'u32[]', space=smem, size = 0x4, offset = 0x4, fixed_abs, tag = 'smem constant byte address 0x4 - core index']
  #allocation1 [shape = 'u32[144,128]{1,0:T(1,128)}', space=vmem, size = 0x12000, scoped, tag = 'internal scratch']
  %s0 = inlined_call_operand.hbm [shape: f32[8,256], index: 0, kind: input, shape index: {}]
  %s1 = inlined_call_operand.vmem [shape: f32[8,1], index: 1, kind: output, shape index: {}]
  %s2 = sld [smem:[#allocation0]]
  $region18: #{tpu_custom_call.1} parent=0
    _
  %s4 = ssub.s32 1, %s2
  %s5 = scalar_select 0, %s4, %s2
  $region1: #{tpu_custom_call.1} parent=0
    #allocation2 [shape = 'u8[8192]{0}', space=vmem, size = 0x2000, scoped, tag = 'input window, operand 0, single buffered']
    #allocation3 [shape = 's32[1]{0}', space=sflag, size = 0x4, scoped, tag = 'scoped memory for tpu_custom_call.1']
    %6 = vsyncpa [#allocation3], 0
    // Predicated region
    $region2: #{tpu_custom_call.1} parent=1 // pred_check
      _
    $region3: #{tpu_custom_call.1} parent=1 // pred_check_branch
      %8 = sbr.rel (0) target = $region5
    $region4: #{tpu_custom_call.1} parent=1 // pred_region
      %s10 = ssub.s32 256, 256
      %11 = vsyncadd [#allocation3], %s10
      %s13 = sshll.u32 [#allocation2], 4
      %s14 = int_to_ptr.vmem [resolvable:$true] %s13
      %16 = dma.hbm_to_vmem [thread:$0]  %s0, 256, %s14, [#allocation3]
    $region5: #{tpu_custom_call.1} parent=1 // pred_fallthru
      _
    // Predicated region
    $region6: #{tpu_custom_call.1} parent=1 // pred_check
      _
    $region7: #{tpu_custom_call.1} parent=1 // pred_check_branch
      %18 = sbr.rel (0) target = $region9
    $region8: #{tpu_custom_call.1} parent=1 // pred_region
      %19 = dma.done [#allocation3], 256
    $region9: #{tpu_custom_call.1} parent=1 // pred_fallthru
      _
    %v20 = vld [vmem:[#allocation2] sm:$0xff]
    %v21 = vld [vmem:[#allocation2 + $0x8] sm:$0xff]
    %v22 = vadd.f32 %v20, %v21
    %23 = vadd.xlane.f32.xlu0 %v22
    %v24 = vpop.xlane.xlu0 %23
    %v25 = vmul.f32 %v24, 0.00390625
    %vm26 = vcmask 7168
    %27 = vst.msk [vmem:[%s1] sm:$0xff] %vm26, %v25
    // Predicated region
    $region10: #{tpu_custom_call.1} parent=1 // pred_check
      _
    $region11: #{tpu_custom_call.1} parent=1 // pred_check_branch
      %29 = sbr.rel (0) target = $region13
    $region12: #{tpu_custom_call.1} parent=1 // pred_region
      _
    $region13: #{tpu_custom_call.1} parent=1 // pred_fallthru
      _
    // Predicated region
    $region14: #{tpu_custom_call.1} parent=1 // pred_check
      _
    $region15: #{tpu_custom_call.1} parent=1 // pred_check_branch
      %31 = sbr.rel (0) target = $region17
    $region16: #{tpu_custom_call.1} parent=1 // pred_region
      _
    $region17: #{tpu_custom_call.1} parent=1 // pred_fallthru
      _
    %32 = vsyncpa [#allocation3], 1

</llo_original>
